<compile_context>
chip_gen: v6e
topology: v6e:2x2x1
jax: 0.10.0
libtpu: 0.0.40
codegen_flags: <defaults>
</compile_context>

<pallas_src>
import jax
import jax.numpy as jnp
from jax.experimental import pallas as pl
from jax.experimental.pallas import tpu as pltpu

_LANE = 128
_NEG_INF = -1e30


def _selector_kernel(x_ref, w_ref, b_ref, o_ref):
    # x_ref : (TB, K)   w_ref : (K, L_pad)   b_ref : (1, L_pad)   o_ref : (TB, L)
    L = o_ref.shape[1]  # static Python int -> static slice below (no VMEM gather)
    logits = jnp.dot(x_ref[...], w_ref[...],
                     preferred_element_type=jnp.float32) + b_ref[...]
    # Numerically stable softmax over the lane-dense padded label axis; padded
    # columns carry bias = -1e30 so exp(pad) == 0 and row sums are exact.
    m = jnp.max(logits, axis=1, keepdims=True)
    e = jnp.exp(logits - m)
    denom = jnp.sum(e, axis=1, keepdims=True)
    # Exact reciprocal keeps 1e-5 parity with the reference (kernel is DMA-bound,
    # so the EUP approx variant would buy nothing anyway).
    probs = e * pl.reciprocal(denom, approx=False)
    # Store only the real L columns (masked partial store, stays in VMEM-rate
    # territory) -- avoids an 8x-padded HBM writeback + wrapper slice pass.
    o_ref[...] = probs[:, :L].astype(o_ref.dtype)


def prepare_selector_params(weight: jax.Array, bias: jax.Array, lane: int = _LANE):
    """One-time staging of PyTorch nn.Linear params (outside the hot path).

    weight: (L, 2H) -> transposed + lane-padded to (2H, L_pad), pad cols = 0
    bias:   (L,)    -> (1, L_pad), pad entries = -1e30 (softmax -> 0)
    """
    L, K = weight.shape
    L_pad = ((L + lane - 1) // lane) * lane
    L_pad = max(L_pad, lane)
    w_t = jnp.zeros((K, L_pad), weight.dtype).at[:, :L].set(weight.T)
    b2d = jnp.full((1, L_pad), _NEG_INF, dtype=bias.dtype).at[0, :L].set(bias)
    return w_t, b2d


def _num_tensorcores() -> int:
    """v7x has 2 TensorCores per chip (sharded via dimension_semantics
    ("parallel",)); v5e/v6e have 1, so the >=2-step grid rule is gated here."""
    try:
        kind = jax.devices()[0].device_kind.lower()
    except Exception:
        return 1
    return 2 if ("v7" in kind or "tpu7" in kind) else 1


def _choose_block_b(B: int, K: int, L_pad: int, num_cores: int = 1,
                    budget_bytes: int = 24 << 20, cap: int = 4096) -> int:
    """Batch tile sized against a conservative VMEM budget.  At TB=4096 the
    double-buffered f32 x+out tiles are only ~6 MiB, well under the 16 MiB
    (v5e) / 32 MiB (v6e/v7x) scoped defaults, so the cap (not the budget) is
    normally what binds; larger tiles amortize per-step pipeline overhead."""
    per_row = (K + L_pad) * 4 * 2            # f32, double-buffered in + out
    tb = max(8, min(cap, budget_bytes // per_row))
    tb = (tb // 8) * 8                        # sublane multiple
    if B <= tb:
        tb = B                                # single full-extent tile
    if num_cores > 1 and B > 8 * num_cores:
        # Keep >= num_cores grid steps along the "parallel" batch axis so a
        # 1-step grid doesn't leave a v7x TensorCore idle.
        per_core = ((-(-B // num_cores)) + 7) // 8 * 8
        tb = min(tb, per_core)
    return tb


def _const_spec(block_shape):
    """Grid-invariant operand (weight/bias): VMEM-resident across grid steps and
    single-buffered -- double-buffering a never-changing block just wastes VMEM
    and DMA bookkeeping.  Falls back to the default spec on JAX versions without
    the pipeline_mode kwarg."""
    idx = lambda i: (0, 0)
    try:
        return pl.BlockSpec(block_shape, idx, pipeline_mode=pl.Buffered(1))
    except (TypeError, AttributeError):
        return pl.BlockSpec(block_shape, idx)


def selector_forward(span_repr: jax.Array, w_prepped: jax.Array,
                     b_prepped: jax.Array, labels_nb: int, *,
                     min_pallas_batch: int = 256,
                     force_pallas: bool = False,
                     block_b: int | None = None) -> jax.Array:
    """
    span_repr: (B, 2, H) float32
    w_prepped: (2H, L_pad) float32   (from prepare_selector_params)
    b_prepped: (1, L_pad)  float32
    returns:   (B, labels_nb) float32 softmax probabilities
    """
    B, two, H = span_repr.shape
    assert two == 2
    K, L_pad = w_prepped.shape
    assert K == 2 * H
    L = labels_nb

    flat = span_repr.reshape(B, K)            # contiguous -> free reshape

    # Tiny-batch fast path: pallas_call launch + pipeline priming dominates for
    # a handful of rows; a fused XLA dot+softmax is lower latency.
    if not force_pallas and B < min_pallas_batch:
        logits = flat @ w_prepped[:, :L] + b_prepped[0, :L]
        return jax.nn.softmax(logits, axis=1)

    TB = block_b if block_b is not None else _choose_block_b(
        B, K, L_pad, _num_tensorcores())
    grid = (pl.cdiv(B, TB),)

    # bytes_accessed reflects the trimmed (B, L) writeback, not the padded one.
    cost = pl.CostEstimate(
        flops=2 * B * K * L_pad,
        transcendentals=B * L_pad,            # exp per (padded) logit
        bytes_accessed=4 * (B * K + K * L_pad + L_pad + B * L),
    )

    # NOTE: if B is not a multiple of TB, the padded rows of the last x block
    # are undefined; any NaN/Inf there is row-local in the softmax and those
    # rows are masked on output writeback -- benign, do not "fix" by reading
    # o_ref back.
    out = pl.pallas_call(
        _selector_kernel,
        out_shape=jax.ShapeDtypeStruct((B, L), jnp.float32),
        grid=grid,
        in_specs=[
            pl.BlockSpec((TB, K), lambda i: (i, 0)),   # batch-tiled activations
            _const_spec((K, L_pad)),                    # VMEM-resident weight
            _const_spec((1, L_pad)),                    # VMEM-resident bias
        ],
        out_specs=pl.BlockSpec((TB, L), lambda i: (i, 0)),   # trimmed output
        compiler_params=pltpu.CompilerParams(
            dimension_semantics=("parallel",)),
        cost_estimate=cost,
    )(flat, w_prepped, b_prepped)
    return out


def _reference(span_repr, weight, bias):
    flat = span_repr.reshape(span_repr.shape[0], -1)
    logits = flat @ weight.T + bias
    return jax.nn.softmax(logits, axis=1)


if __name__ == "__main__":
    key = jax.random.PRNGKey(0)
    k_x, k_w, k_b, k_x2 = jax.random.split(key, 4)

    # small shapes consistent with the module
    B, H, L = 8, 32, 16
    span_repr = jax.random.normal(k_x, (B, 2, H), dtype=jnp.float32)
    bound = 1.0 / jnp.sqrt(2.0 * H)
    weight = jax.random.uniform(k_w, (L, 2 * H), minval=-bound, maxval=bound,
                                dtype=jnp.float32)
    bias = jax.random.uniform(k_b, (L,), minval=-bound, maxval=bound,
                              dtype=jnp.float32)

    # one-time param staging (pre-transpose + lane padding), off the hot path
    w_prepped, b_prepped = prepare_selector_params(weight, bias)
    ref = _reference(span_repr, weight, bias)

    # 1) small batch forced through the Pallas kernel
    out = jax.block_until_ready(
        selector_forward(span_repr, w_prepped, b_prepped, L, force_pallas=True))
    assert out.shape == (B, L)
    assert jnp.allclose(out, ref, atol=1e-5, rtol=1e-5)
    assert jnp.allclose(jnp.sum(out, axis=1), jnp.ones((B,)), atol=1e-5)

    # 2) same small batch via the tiny-B XLA fallback path
    out_fb = jax.block_until_ready(
        selector_forward(span_repr, w_prepped, b_prepped, L))
    assert jnp.allclose(out_fb, ref, atol=1e-5, rtol=1e-5)

    # 3) large batch: auto-tiled grid ("parallel" batch axis; >=2 steps on v7x)
    B2 = 2048
    span_repr2 = jax.random.normal(k_x2, (B2, 2, H), dtype=jnp.float32)
    ref2 = _reference(span_repr2, weight, bias)
    out2 = jax.block_until_ready(
        selector_forward(span_repr2, w_prepped, b_prepped, L))
    assert out2.shape == (B2, L)
    assert jnp.allclose(out2, ref2, atol=1e-5, rtol=1e-5)

    # 4) explicitly exercise a multi-step grid with a partial last batch tile
    out3 = jax.block_until_ready(
        selector_forward(span_repr2, w_prepped, b_prepped, L, block_b=768))
    assert jnp.allclose(out3, ref2, atol=1e-5, rtol=1e-5)

    print("KERNEL_OK")
</pallas_src>

<mosaic_0001>
module attributes {stable_mosaic.version = 11 : i64} {
  func.func @_selector_kernel(%arg0: i32, %arg1: memref<8x64xf32, #tpu.memory_space<vmem>>, %arg2: memref<64x128xf32, #tpu.memory_space<vmem>>, %arg3: memref<1x128xf32, #tpu.memory_space<vmem>>, %arg4: memref<8x16xf32, #tpu.memory_space<vmem>>) attributes {dimension_semantics = [#tpu.dimension_semantics<parallel>], iteration_bounds = array<i64: 1>, scalar_prefetch = 0 : i64, scratch_operands = 0 : i64, tpu.core_type = #tpu.core_type<tc>, window_params = [{transform_indices = @transform_0, window_bounds = array<i64: 8, 64>}, {pipeline_mode = #tpu.pipeline_mode<synchronous>, transform_indices = @transform_1, window_bounds = array<i64: 64, 128>}, {pipeline_mode = #tpu.pipeline_mode<synchronous>, transform_indices = @transform_2, window_bounds = array<i64: 1, 128>}, {transform_indices = @transform_3, window_bounds = array<i64: 8, 16>}]} {
    %c0 = arith.constant 0 : index
    %c0_0 = arith.constant 0 : index
    %0 = vector.load %arg1[%c0, %c0_0] : memref<8x64xf32, #tpu.memory_space<vmem>>, vector<8x64xf32>
    %c0_1 = arith.constant 0 : index
    %c0_2 = arith.constant 0 : index
    %1 = vector.load %arg2[%c0_1, %c0_2] : memref<64x128xf32, #tpu.memory_space<vmem>>, vector<64x128xf32>
    %cst = arith.constant dense<0.000000e+00> : vector<8x128xf32>
    %2 = tpu.matmul %0, %1, %cst {dimension_numbers = #tpu.dot_dimension_numbers<[1], [0], [0], [1], [0, 0, 1, 1], [], []>} : vector<8x64xf32>, vector<64x128xf32>, vector<8x128xf32> -> vector<8x128xf32>
    %c0_3 = arith.constant 0 : index
    %c0_4 = arith.constant 0 : index
    %3 = vector.load %arg3[%c0_3, %c0_4] : memref<1x128xf32, #tpu.memory_space<vmem>>, vector<1x128xf32>
    %4 = vector.broadcast %3 : vector<1x128xf32> to vector<8x128xf32>
    %5 = arith.addf %2, %4 : vector<8x128xf32>
    %cst_5 = arith.constant dense<0xFF800000> : vector<8xf32>
    %6 = vector.multi_reduction <maximumf>, %5, %cst_5 [1] : vector<8x128xf32> to vector<8xf32>
    %7 = vector.shape_cast %6 : vector<8xf32> to vector<8x1xf32>
    %8 = vector.broadcast %7 : vector<8x1xf32> to vector<8x128xf32>
    %9 = arith.subf %5, %8 : vector<8x128xf32>
    %10 = math.exp %9 : vector<8x128xf32>
    %cst_6 = arith.constant dense<0.000000e+00> : vector<8xf32>
    %11 = vector.multi_reduction <add>, %10, %cst_6 [1] : vector<8x128xf32> to vector<8xf32>
    %12 = vector.shape_cast %11 : vector<8xf32> to vector<8x1xf32>
    %13 = tpu.reciprocal %12 : vector<8x1xf32> -> vector<8x1xf32>
    %14 = vector.broadcast %13 : vector<8x1xf32> to vector<8x128xf32>
    %15 = arith.mulf %10, %14 : vector<8x128xf32>
    %16 = vector.extract_strided_slice %15 {offsets = [0, 0], sizes = [8, 16], strides = [1, 1]} : vector<8x128xf32> to vector<8x16xf32>
    %c0_7 = arith.constant 0 : index
    %c0_8 = arith.constant 0 : index
    %17 = vector.load %arg4[%c0_7, %c0_8] : memref<8x16xf32, #tpu.memory_space<vmem>>, vector<8x16xf32>
    tpu.vector_store %arg4[%c0_7, %c0_8], %16 {strides = array<i32>} : memref<8x16xf32, #tpu.memory_space<vmem>>, vector<8x16xf32>,
    return
  }
  func.func @transform_0(%arg0: i32) -> (i32, i32) {
    %c0_i32 = arith.constant 0 : i32
    %c0_i32_0 = arith.constant 0 : i32
    return %arg0, %c0_i32 : i32, i32
  }
  func.func @transform_1(%arg0: i32) -> (i32, i32) {
    %c0_i32 = arith.constant 0 : i32
    %c0_i32_0 = arith.constant 0 : i32
    %c0_i32_1 = arith.constant 0 : i32
    return %c0_i32, %c0_i32_0 : i32, i32
  }
  func.func @transform_2(%arg0: i32) -> (i32, i32) {
    %c0_i32 = arith.constant 0 : i32
    %c0_i32_0 = arith.constant 0 : i32
    %c0_i32_1 = arith.constant 0 : i32
    return %c0_i32, %c0_i32_0 : i32, i32
  }
  func.func @transform_3(%arg0: i32) -> (i32, i32) {
    %c0_i32 = arith.constant 0 : i32
    %c0_i32_0 = arith.constant 0 : i32
    return %arg0, %c0_i32 : i32, i32
  }
}

</mosaic_0001>

<llo_original>
// kernel: tpu_custom_call.1
$region0: #{tpu_custom_call.1}
  #allocation0 [shape = 'u32[]', space=smem, size = 0x4, offset = 0x4, fixed_abs, tag = 'smem constant byte address 0x4 - core index']
  #allocation1 [shape = 'u32[144,128]{1,0:T(1,128)}', space=vmem, size = 0x12000, scoped, tag = 'internal scratch']
  %s0 = inlined_call_operand.hbm [shape: f32[8,64], index: 0, kind: input, shape index: {}]
  %s1 = inlined_call_operand.hbm [shape: f32[64,128], index: 1, kind: input, shape index: {}]
  %s2 = inlined_call_operand.vmem [shape: f32[1,128], index: 2, kind: input, shape index: {}]
  %s3 = inlined_call_operand.hbm [shape: f32[8,16], index: 3, kind: output, shape index: {}]
  %s4 = sld [smem:[#allocation0]]
  $region30: #{tpu_custom_call.1} parent=0
    _
  %s6 = ssub.s32 1, %s4
  %s7 = scalar_select 0, %s6, %s4
  $region1: #{tpu_custom_call.1} parent=0
    #allocation2 [shape = 'u8[4096]{0}', space=vmem, size = 0x1000, scoped, tag = 'input window, operand 0, single buffered']
    #allocation3 [shape = 's32[1]{0}', space=sflag, size = 0x4, scoped, tag = 'scoped memory for tpu_custom_call.1']
    #allocation4 [shape = 's32[1]{0}', space=sflag, size = 0x4, scoped, tag = 'scoped memory for tpu_custom_call.1']
    #allocation5 [shape = 'u8[32768]{0}', space=vmem, size = 0x8000, scoped, tag = 'input window, operand 1, single buffered']
    #allocation6 [shape = 's32[1]{0}', space=sflag, size = 0x4, scoped, tag = 'scoped memory for tpu_custom_call.1']
    #allocation7 [shape = 'u8[4096]{0}', space=vmem, size = 0x1000, scoped, tag = 'output window, operand 0, single buffered']
    %8 = vsyncpa [#allocation3], 0
    %9 = vsyncpa [#allocation6], 0
    %10 = vsyncpa [#allocation4], 0
    // Predicated region
    $region2: #{tpu_custom_call.1} parent=1 // pred_check
      _
    $region3: #{tpu_custom_call.1} parent=1 // pred_check_branch
      %12 = sbr.rel (0) target = $region5
    $region4: #{tpu_custom_call.1} parent=1 // pred_region
      %s14 = ssub.s32 128, 128
      %15 = vsyncadd [#allocation3], %s14
      %s17 = sshll.u32 [#allocation2], 4
      %s18 = int_to_ptr.vmem [resolvable:$true] %s17
      %20 = dma.hbm_to_vmem [thread:$0]  %s0, 128, %s18, [#allocation3]
    $region5: #{tpu_custom_call.1} parent=1 // pred_fallthru
      _
    // Predicated region
    $region6: #{tpu_custom_call.1} parent=1 // pred_check
      _
    $region7: #{tpu_custom_call.1} parent=1 // pred_check_branch
      %22 = sbr.rel (0) target = $region9
    $region8: #{tpu_custom_call.1} parent=1 // pred_region
      %s24 = ssub.s32 1024, 1024
      %25 = vsyncadd [#allocation6], %s24
      %s26 = sshll.u32 [#allocation5], 4
      %s27 = int_to_ptr.vmem [resolvable:$true] %s26
      %32 = dma.hbm_to_vmem [thread:$0]  %s1, 1024, %s27, [#allocation6], 128, 128, 8
    $region9: #{tpu_custom_call.1} parent=1 // pred_fallthru
      _
    // Predicated region
    $region10: #{tpu_custom_call.1} parent=1 // pred_check
      _
    $region11: #{tpu_custom_call.1} parent=1 // pred_check_branch
      %34 = sbr.rel (0) target = $region13
    $region12: #{tpu_custom_call.1} parent=1 // pred_region
      _
    $region13: #{tpu_custom_call.1} parent=1 // pred_fallthru
      _
    // Predicated region
    $region14: #{tpu_custom_call.1} parent=1 // pred_check
      _
    $region15: #{tpu_custom_call.1} parent=1 // pred_check_branch
      %36 = sbr.rel (0) target = $region17
    $region16: #{tpu_custom_call.1} parent=1 // pred_region
      %37 = dma.done [#allocation3], 128
    $region17: #{tpu_custom_call.1} parent=1 // pred_fallthru
      _
    // Predicated region
    $region18: #{tpu_custom_call.1} parent=1 // pred_check
      _
    $region19: #{tpu_custom_call.1} parent=1 // pred_check_branch
      %39 = sbr.rel (0) target = $region21
    $region20: #{tpu_custom_call.1} parent=1 // pred_region
      %40 = dma.done [#allocation6], 1024
    $region21: #{tpu_custom_call.1} parent=1 // pred_fallthru
      _
    %v41 = vld [vmem:[#allocation2] sm:$0xff]
    %v42 = vld [vmem:[#allocation5] sm:$0xff]
    %v43 = vld [vmem:[#allocation5 + $0x8] sm:$0xff]
    %v44 = vld [vmem:[#allocation5 + $0x10] sm:$0xff]
    %v45 = vld [vmem:[#allocation5 + $0x18] sm:$0xff]
    %v46 = vld [vmem:[#allocation5 + $0x20] sm:$0xff]
    %v47 = vld [vmem:[#allocation5 + $0x28] sm:$0xff]
    %v48 = vld [vmem:[#allocation5 + $0x30] sm:$0xff]
    %v49 = vld [vmem:[#allocation5 + $0x38] sm:$0xff]
    %v50 = vld [vmem:[%s2] sm:$0x1]
    %v52 = vlaneseq
    %v53 = vshrl.u32 %v52, 7
    %v54 = vsub.s32 0, %v53
    %v55 = vrot.slane %v50, %v54
    %vm57 = vcmask 523264
    %v59 = vsel %vm57, %v41, 0
    %61 = vmatprep.subr.mxu0 0.0
    %62 = vmatpush1.msra.mxu0 0.0
    %63 = vmatprep.subr.mxu0 0.0
    %64 = vmatpush1.msra.mxu0 0.0
    %65 = vmatprep.subr.mxu0 0.0
    %66 = vmatpush1.msra.mxu0 0.0
    %67 = vmatprep.subr.mxu0 0.0
    %68 = vmatpush1.msra.mxu0 0.0
    %69 = vmatprep.subr.mxu0 0.0
    %70 = vmatpush1.msra.mxu0 0.0
    %71 = vmatprep.subr.mxu0 0.0
    %72 = vmatpush1.msra.mxu0 0.0
    %73 = vmatprep.subr.mxu0 0.0
    %74 = vmatpush1.msra.mxu0 0.0
    %75 = vmatprep.subr.mxu0 0.0
    %76 = vmatpush1.msra.mxu0 0.0
    %77 = vmatprep.subr.mxu0 0.0
    %78 = vmatpush1.msra.mxu0 %v49
    %79 = vmatprep.subr.mxu0 0.0
    %80 = vmatpush1.msra.mxu0 %v48
    %81 = vmatprep.subr.mxu0 0.0
    %82 = vmatpush1.msra.mxu0 %v47
    %83 = vmatprep.subr.mxu0 0.0
    %84 = vmatpush1.msra.mxu0 %v46
    %85 = vmatprep.subr.mxu0 0.0
    %86 = vmatpush1.msra.mxu0 %v45
    %87 = vmatprep.subr.mxu0 0.0
    %88 = vmatpush1.msra.mxu0 %v44
    %89 = vmatprep.subr.mxu0 0.0
    %90 = vmatpush1.msra.mxu0 %v43
    %91 = vmatprep.subr.mxu0 0.0
    %92 = vmatpush1.msra.mxu0 %v42
    %93 = vmatprep.subr.mxu0 0.0
    %94 = vmatpush2.msra.mxu0 0.0
    %95 = vmatprep.subr.mxu0 0.0
    %96 = vmatpush2.msra.mxu0 0.0
    %97 = vmatprep.subr.mxu0 0.0
    %98 = vmatpush2.msra.mxu0 0.0
    %99 = vmatprep.subr.mxu0 0.0
    %100 = vmatpush2.msra.mxu0 0.0
    %101 = vmatprep.subr.mxu0 0.0
    %102 = vmatpush2.msra.mxu0 0.0
    %103 = vmatprep.subr.mxu0 0.0
    %104 = vmatpush2.msra.mxu0 0.0
    %105 = vmatprep.subr.mxu0 0.0
    %106 = vmatpush2.msra.mxu0 0.0
    %107 = vmatprep.subr.mxu0 0.0
    %108 = vmatpush2.msra.mxu0 0.0
    %109 = vmatprep.subr.mxu0 0.0
    %110 = vmatpush2.msra.mxu0 0.0
    %111 = vmatprep.subr.mxu0 0.0
    %112 = vmatpush2.msra.mxu0 0.0
    %113 = vmatprep.subr.mxu0 0.0
    %114 = vmatpush2.msra.mxu0 0.0
    %115 = vmatprep.subr.mxu0 0.0
    %116 = vmatpush2.msra.mxu0 0.0
    %117 = vmatprep.subr.mxu0 0.0
    %118 = vmatpush2.msra.mxu0 0.0
    %119 = vmatprep.subr.mxu0 0.0
    %120 = vmatpush2.msra.mxu0 0.0
    %121 = vmatprep.subr.mxu0 0.0
    %122 = vmatpush2.msra.mxu0 0.0
    %123 = vmatprep.subr.mxu0 0.0
    %124 = vmatpush2.msra.mxu0 0.0
    %125 = vmatprep.mubr.f32.mxu0 0.0
    %126 = vmatmul.mubr.f32.gmra.mxu0 %v59
    %v127 = vpop.f32.mrf.mxu0
    %v128 = vadd.f32 %v55, %v127
    %v129 = vpop.f32.mrf.mxu0
    %130 = vdwg.mxu0
    %131 = vmax.xlane.f32.xlu0 %v128
    %v132 = vpop.xlane.xlu0 %131
    %v133 = vsub.f32 %v128, %v132
    %v134 = vmul.f32 %v133, 1.442695
    %v135 = vpow.pop %v134
    %136 = vadd.xlane.f32.xlu0 %v135
    %v137 = vpop.xlane.xlu0 %136
    %v138 = vrcp.pop %v137
    %v139 = vmul.f32 %v135, %v138
    %vm140 = vcmask 130048
    %141 = vst.msk [vmem:[#allocation7] sm:$0xff] %vm140, %v139
    // Predicated region
    $region22: #{tpu_custom_call.1} parent=1 // pred_check
      _
    $region23: #{tpu_custom_call.1} parent=1 // pred_check_branch
      %143 = sbr.rel (0) target = $region25
    $region24: #{tpu_custom_call.1} parent=1 // pred_region
      %s145 = ssub.s32 128, 128
      %146 = vsyncadd [#allocation4], %s145
      %s148 = sshll.u32 [#allocation7], 4
      %s149 = int_to_ptr.vmem [resolvable:$true] %s148
      %151 = dma.vmem_to_hbm [thread:$0]  %s149, 128, %s3, [#allocation4]
    $region25: #{tpu_custom_call.1} parent=1 // pred_fallthru
      _
    // Predicated region
    $region26: #{tpu_custom_call.1} parent=1 // pred_check
      _
    $region27: #{tpu_custom_call.1} parent=1 // pred_check_branch
      %153 = sbr.rel (0) target = $region29
    $region28: #{tpu_custom_call.1} parent=1 // pred_region
      %154 = dma.done [#allocation4], 128
    $region29: #{tpu_custom_call.1} parent=1 // pred_fallthru
      _
    %155 = vsyncpa [#allocation3], 1
    %156 = vsyncpa [#allocation6], 1
    %157 = vsyncpa [#allocation4], 1

</llo_original>
